<compile_context>
chip_gen: v6e
topology: v6e:2x2x1
jax: 0.10.0
libtpu: 0.0.40
codegen_flags: <defaults>
</compile_context>

<pallas_src>
import functools
import math

import jax
import jax.numpy as jnp
from jax import lax
from jax.experimental import pallas as pl
from jax.experimental.pallas import tpu as pltpu

CA_IDX = 1  # BBHeavyAtom.CA


# ----------------------------------------------------------------------------------------------
# Kernel
# ----------------------------------------------------------------------------------------------
def _ipa_ed_kernel(h_ref, m_ref, hout_ref, hmix_ref, *, d, l_total, lane_dense):
    # h_ref    : (TL, A*D)  atom features of TL residues, atoms folded into the lane axis
    # m_ref    : (TL, A+1)  cols 0..A-1 = keep mask per atom, col A = CA residue mask (f32 {0,1})
    # hout_ref : normalized per-residue representation (batch_repr)
    # hmix_ref : H_mixer = batch_repr * mask_residue
    tl = h_ref.shape[0]
    a = m_ref.shape[1] - 1

    # Row-validity: the last residue tile may be padded past L; zero padded rows so the
    # normalization below never sees stale-VMEM garbage (no NaN/inf even in discarded lanes).
    row = pl.program_id(1) * tl + lax.broadcasted_iota(jnp.int32, (tl, 1), 0)
    valid = row < l_total

    m = jnp.where(valid, m_ref[...], 0.0)                      # (TL, A+1), one small load
    h = h_ref[...].astype(jnp.float32)                         # f32 accumulation regardless of HBM dtype

    # scatter_sum over the residue block: A static lane-slice multiply-adds (atoms live in lanes,
    # so the H DMA is lane-dense and no in-kernel (L*A, D) -> (L, A, D) sublane reshape is needed).
    acc = h[:, 0:d] * m[:, 0:1]
    for at in range(1, a):                                     # A is small & static -> unrolled
        acc = acc + h[:, at * d:(at + 1) * d] * m[:, at:at + 1]
    acc = jnp.where(valid, acc, 0.0)                           # kill any NaN from padded H rows

    # F.normalize(dim=-1) twice (exact parity with the torch module), eps = 1e-12.
    # x / max(||x||, eps) == x * rsqrt(max(||x||^2, eps^2)); rsqrt runs on the EUP slot.
    eps = 1e-12
    ss = jnp.sum(acc * acc, axis=-1, keepdims=True)
    res = acc * lax.rsqrt(jnp.maximum(ss, eps * eps))
    # Second normalize kept for exact module parity (only differs in the ||x|| < eps corner case).
    ss2 = jnp.sum(res * res, axis=-1, keepdims=True)
    res = res * lax.rsqrt(jnp.maximum(ss2, eps * eps))

    mix = res * m[:, a:a + 1]                                  # H_mixer = batch_repr * CA residue mask

    if lane_dense:
        # Present both outputs lane-dense: (TL, D) -> (TL*D//128, 128); the relayout lands on the
        # otherwise idle XLU and turns the stores into unmasked full-width vst.
        rows128 = (tl * d) // 128
        hout_ref[...] = res.reshape(rows128, 128).astype(hout_ref.dtype)
        hmix_ref[...] = mix.reshape(rows128, 128).astype(hmix_ref.dtype)
    else:
        hout_ref[...] = res.astype(hout_ref.dtype)
        hmix_ref[...] = mix.astype(hmix_ref.dtype)


# ----------------------------------------------------------------------------------------------
# Wrapper-side helpers
# ----------------------------------------------------------------------------------------------
def _ceil_div(a, b):
    return -(-a // b)


def _round_up(x, m):
    return _ceil_div(x, m) * m


def _hw_budgets():
    """(per-step block byte target, vmem_limit cap) derived from the VMEM capacity of this part."""
    try:
        cap = int(getattr(pltpu.get_tpu_info(), "vmem_capacity_bytes", 0))
    except Exception:  # query unavailable -> be conservative
        cap = 0
    if cap >= 100 * 1024 * 1024:          # v5e / v6e class parts (128 MiB physical VMEM)
        return 16 * 1024 * 1024, 64 * 1024 * 1024
    return 8 * 1024 * 1024, 32 * 1024 * 1024   # v7x class (64 MiB physical) or unknown


def _choose_residue_tile(n, l, a, d, h_itemsize, out_itemsize, target_bytes, granule):
    """Largest residue tile (multiple of `granule`, or full L) whose per-step block bytes fit the
    target, additionally capped so that >= 4 grid points exist when L allows it (v7x: 2 TCs)."""
    row_bytes = a * d * h_itemsize + (a + 1) * 4 + 2 * d * out_itemsize
    tl = max(granule, (target_bytes // row_bytes) // granule * granule)
    MIN_GRID_POINTS = 4
    if n * _ceil_div(l, min(tl, l)) < MIN_GRID_POINTS and l > granule:
        want_tiles = _ceil_div(MIN_GRID_POINTS, n)
        cap = _round_up(_ceil_div(l, want_tiles), granule)
        tl = max(granule, min(tl, cap))
    if tl >= l:
        tl = l
    return int(tl)


_RESHAPE_PROBE_CACHE = {}


def _lane_dense_reshape_supported(tl, d):
    """COMPILE-ONLY probe: does Mosaic support the in-kernel (tl, d) -> (tl*d//128, 128) f32
    reshape used for lane-dense output stores?  Cached; never executes on device."""
    if (tl * d) % 128 != 0:
        return False
    key = (int(tl), int(d))
    if key in _RESHAPE_PROBE_CACHE:
        return _RESHAPE_PROBE_CACHE[key]
    rows128 = (tl * d) // 128

    def probe(x_ref, o_ref):
        o_ref[...] = (x_ref[...] * 2.0).reshape(rows128, 128)

    ok = True
    try:
        fn = pl.pallas_call(probe, out_shape=jax.ShapeDtypeStruct((rows128, 128), jnp.float32))
        jax.jit(fn).lower(jnp.zeros((tl, d), jnp.float32)).compile()
    except Exception:
        ok = False
    _RESHAPE_PROBE_CACHE[key] = ok
    return ok


# ----------------------------------------------------------------------------------------------
# Public forward
# ----------------------------------------------------------------------------------------------
def equivariant_ipa_ed_forward(R_t, p_t, H, Z, block_id, batch_id, edges, edge_attr,
                               mask_generate, mask_atoms, pair_feat, node_feat_dim,
                               out_dtype=None):
    """Returns (res_feat, H_batch, Z_global).  res_feat == H_mixer (decoder TODO).
    out_dtype defaults to H.dtype (pass bf16 H to halve HBM traffic on this memory-bound op)."""
    del R_t, p_t, batch_id, edges, edge_attr, pair_feat  # consumed only by TODO'd submodules
    N, L, A = mask_atoms.shape
    D = node_feat_dim
    out_dtype = jnp.dtype(H.dtype if out_dtype is None else out_dtype)

    # TODO(synk): general scatter_sum not implemented; validate regular A-atom blocks when concrete.
    if block_id is not None:
        try:
            expected = jnp.repeat(jnp.arange(N * L, dtype=jnp.int32), A)
            ok = (block_id.shape == (N * L * A,)
                  and bool(jnp.all(block_id.astype(jnp.int32) == expected)))
        except jax.errors.ConcretizationTypeError:
            ok = True  # traced -> cannot verify here
        if not ok:
            raise ValueError("equivariant_ipa_ed_forward: block_id must equal "
                             "repeat_interleave(arange(N*L), A) (regular residue blocks).")

    # --- wrapper-side (cheap, O(N*L*A)) mask prep + Z path ---------------------------------
    keep = jnp.logical_or(mask_generate[:, :, None], mask_atoms)            # torch.where(gen, 1, atoms)
    keep_f = keep.astype(jnp.float32)
    mask_res = mask_atoms[:, :, CA_IDX].astype(jnp.float32)                 # (N, L)
    masks = jnp.concatenate([keep_f, mask_res[:, :, None]], axis=-1)        # (N, L, A+1)

    # Z_global: pure elementwise mask-multiply with last dim 3 -> leave to XLA (fused, lane-dense).
    z_global = Z.reshape(N, L, A, 3) * keep.astype(Z.dtype)[:, :, :, None]  # (N, L, A, 3)

    # --- H path: fold atoms into the lane axis (free reshape of the contiguous buffer) -----
    H3 = H.reshape(N, L, A * D)                                             # lane-dense DMA

    target_bytes, vmem_cap = _hw_budgets()
    lane_dense_wanted = (D % 128) != 0 and (L * D) % 128 == 0
    # Tile granularity: 8 sublanes for the (TL, A*D) input block; for the lane-dense output view we
    # also need TL*D % 1024 == 0 (block second-minor dim divisible by 8) unless TL == L.
    granule = math.lcm(8, 1024 // math.gcd(D, 1024)) if lane_dense_wanted else 8
    TL = _choose_residue_tile(N, L, A, D, jnp.dtype(H3.dtype).itemsize, out_dtype.itemsize,
                              target_bytes, granule)
    lane_dense = (lane_dense_wanted
                  and (TL == L or (TL * D) % 1024 == 0)
                  and _lane_dense_reshape_supported(TL, D))

    grid = (N, pl.cdiv(L, TL))

    if lane_dense:
        rows_total, rows_block = (L * D) // 128, (TL * D) // 128
        out_shapes = (jax.ShapeDtypeStruct((N, rows_total, 128), out_dtype),
                      jax.ShapeDtypeStruct((N, rows_total, 128), out_dtype))
        out_specs = (pl.BlockSpec((None, rows_block, 128), lambda n, t: (n, t, 0)),
                     pl.BlockSpec((None, rows_block, 128), lambda n, t: (n, t, 0)))
    else:
        out_shapes = (jax.ShapeDtypeStruct((N, L, D), out_dtype),
                      jax.ShapeDtypeStruct((N, L, D), out_dtype))
        out_specs = (pl.BlockSpec((None, TL, D), lambda n, t: (n, t, 0)),
                     pl.BlockSpec((None, TL, D), lambda n, t: (n, t, 0)))

    # Explicit scoped-VMEM sizing: double-buffered block bytes + headroom, capped per generation.
    block_bytes = (TL * A * D * jnp.dtype(H3.dtype).itemsize
                   + TL * (A + 1) * 4
                   + 2 * TL * D * out_dtype.itemsize)
    vmem_limit = int(min(vmem_cap, max(8 * 1024 * 1024, 2 * block_bytes + 2 * 1024 * 1024)))

    kernel = functools.partial(_ipa_ed_kernel, d=D, l_total=L, lane_dense=lane_dense)

    h_out, h_mixer = pl.pallas_call(
        kernel,
        out_shape=out_shapes,
        grid=grid,
        in_specs=[
            pl.BlockSpec((None, TL, A * D), lambda n, t: (n, t, 0)),
            pl.BlockSpec((None, TL, A + 1), lambda n, t: (n, t, 0)),
        ],
        out_specs=out_specs,
        compiler_params=pltpu.CompilerParams(
            dimension_semantics=("parallel", "parallel"),
            vmem_limit_bytes=vmem_limit,
        ),
    )(H3, masks)

    h_out = h_out.reshape(N, L, D)        # free view back to the logical layout
    h_mixer = h_mixer.reshape(N, L, D)

    res_feat = h_mixer  # TODO(synk): GAEncoder decoder would map (R_t, p_t, H_mixer, pair_feat, mask) -> res_feat
    return res_feat, h_out, z_global


# ----------------------------------------------------------------------------------------------
# Plain-JAX reference of the specified (non-TODO) math
# ----------------------------------------------------------------------------------------------
def _reference(H, Z, mask_generate, mask_atoms, node_feat_dim):
    N, L, A = mask_atoms.shape
    D = node_feat_dim
    mask = jnp.logical_or(mask_generate[:, :, None], mask_atoms).astype(jnp.float32)
    Hm = H.reshape(N, L, A, D).astype(jnp.float32) * mask[..., None]
    res = jnp.sum(Hm, axis=2)                                                # (N, L, D)
    eps = 1e-12
    res = res / jnp.maximum(jnp.linalg.norm(res, axis=-1, keepdims=True), eps)
    res = res / jnp.maximum(jnp.linalg.norm(res, axis=-1, keepdims=True), eps)
    mask_res = mask_atoms[:, :, CA_IDX].astype(jnp.float32)
    h_mixer = res * mask_res[:, :, None]
    z_global = Z.reshape(N, L, A, 3) * mask[..., None]
    return h_mixer, res, z_global


if __name__ == "__main__":
    key = jax.random.PRNGKey(0)
    N, L, A = 2, 8, 4            # batch, residues per item, atoms per residue block
    D = 32                       # node_feat_dim
    E_FEAT = 16                  # edge_feat_dim
    n_atoms = N * L * A

    k = jax.random.split(key, 8)
    H = jax.random.normal(k[0], (n_atoms, D), dtype=jnp.float32)
    Z = jax.random.normal(k[1], (n_atoms, 3), dtype=jnp.float32)
    block_id = jnp.repeat(jnp.arange(N * L, dtype=jnp.int32), A)
    batch_id = jnp.repeat(jnp.arange(N, dtype=jnp.int32), L * A)
    edges = jax.random.randint(k[2], (2, 10), 0, n_atoms, dtype=jnp.int32)
    edge_attr = jax.random.normal(k[3], (10, E_FEAT), dtype=jnp.float32)
    mask_generate = jax.random.bernoulli(k[4], 0.3, (N, L))
    mask_atoms = jax.random.bernoulli(k[5], 0.8, (N, L, A))
    R_t = jnp.tile(jnp.eye(3, dtype=jnp.float32), (N, L, 1, 1))
    p_t = jax.random.normal(k[6], (N, L, 3), dtype=jnp.float32)
    pair_feat = jax.random.normal(k[7], (N, L, L, E_FEAT), dtype=jnp.float32)

    # f32 run (exact-parity check against the plain-JAX reference of the specified math)
    res_feat, h_out, z_global = equivariant_ipa_ed_forward(
        R_t, p_t, H, Z, block_id, batch_id, edges, edge_attr,
        mask_generate, mask_atoms, pair_feat, node_feat_dim=D)
    jax.block_until_ready((res_feat, h_out, z_global))

    ref_mix, ref_h, ref_z = _reference(H, Z, mask_generate, mask_atoms, D)
    assert res_feat.shape == (N, L, D) and h_out.shape == (N, L, D) and z_global.shape == (N, L, A, 3)
    assert jnp.allclose(res_feat, ref_mix, atol=1e-5), "H_mixer mismatch"
    assert jnp.allclose(h_out, ref_h, atol=1e-5), "H mismatch"
    assert jnp.allclose(z_global, ref_z, atol=1e-5), "Z_global mismatch"

    # bf16 I/O run (perf-review item: halve HBM bytes; kernel still accumulates in f32)
    res_bf, h_bf, _ = equivariant_ipa_ed_forward(
        R_t, p_t, H.astype(jnp.bfloat16), Z, block_id, batch_id, edges, edge_attr,
        mask_generate, mask_atoms, pair_feat, node_feat_dim=D)
    jax.block_until_ready((res_bf, h_bf))
    assert res_bf.dtype == jnp.bfloat16 and h_bf.dtype == jnp.bfloat16
    assert jnp.allclose(res_bf.astype(jnp.float32), ref_mix, atol=5e-2), "bf16 H_mixer mismatch"
    assert jnp.allclose(h_bf.astype(jnp.float32), ref_h, atol=5e-2), "bf16 H mismatch"

    print("KERNEL_OK")
</pallas_src>

<mosaic_0001>
module attributes {stable_mosaic.version = 11 : i64} {
  func.func @_ipa_ed_kernel(%arg0: i32, %arg1: i32, %arg2: memref<1x8x128xf32, #tpu.memory_space<vmem>>, %arg3: memref<1x8x5xf32, #tpu.memory_space<vmem>>, %arg4: memref<1x8x32xf32, #tpu.memory_space<vmem>>, %arg5: memref<1x8x32xf32, #tpu.memory_space<vmem>>) attributes {dimension_semantics = [#tpu.dimension_semantics<parallel>, #tpu.dimension_semantics<parallel>], iteration_bounds = array<i64: 2, 1>, scalar_prefetch = 0 : i64, scratch_operands = 0 : i64, tpu.core_type = #tpu.core_type<tc>, window_params = [{transform_indices = @transform_0, window_bounds = array<i64: 1, 8, 128>}, {transform_indices = @transform_1, window_bounds = array<i64: 1, 8, 5>}, {transform_indices = @transform_2, window_bounds = array<i64: 1, 8, 32>}, {transform_indices = @transform_3, window_bounds = array<i64: 1, 8, 32>}]} {
    %c8_i32 = arith.constant 8 : i32
    %0 = arith.muli %arg1, %c8_i32 : i32
    %1 = tpu.iota {dimensions = array<i32: 0>} : vector<8x1xi32>
    %2 = vector.broadcast %0 : i32 to vector<8x1xi32>
    %3 = arith.addi %2, %1 : vector<8x1xi32>
    %c8_i32_0 = arith.constant 8 : i32
    %4 = vector.broadcast %c8_i32_0 : i32 to vector<8x1xi32>
    %5 = arith.cmpi slt, %3, %4 : vector<8x1xi32>
    %c0 = arith.constant 0 : index
    %c0_1 = arith.constant 0 : index
    %c0_2 = arith.constant 0 : index
    %6 = vector.load %arg3[%c0, %c0_1, %c0_2] : memref<1x8x5xf32, #tpu.memory_space<vmem>>, vector<1x8x5xf32>
    %7 = vector.shape_cast %6 : vector<1x8x5xf32> to vector<8x5xf32>
    %cst = arith.constant 0.000000e+00 : f32
    %8 = vector.shape_cast %5 : vector<8x1xi1> to vector<8x1xi1>
    %9 = vector.broadcast %8 : vector<8x1xi1> to vector<8x5xi1>
    %10 = vector.broadcast %cst : f32 to vector<8x5xf32>
    %11 = arith.select %9, %7, %10 : vector<8x5xi1>, vector<8x5xf32>
    %c0_3 = arith.constant 0 : index
    %c0_4 = arith.constant 0 : index
    %c0_5 = arith.constant 0 : index
    %12 = vector.load %arg2[%c0_3, %c0_4, %c0_5] : memref<1x8x128xf32, #tpu.memory_space<vmem>>, vector<1x8x128xf32>
    %13 = vector.shape_cast %12 : vector<1x8x128xf32> to vector<8x128xf32>
    %14 = vector.extract_strided_slice %13 {offsets = [0, 0], sizes = [8, 32], strides = [1, 1]} : vector<8x128xf32> to vector<8x32xf32>
    %15 = vector.extract_strided_slice %11 {offsets = [0, 0], sizes = [8, 1], strides = [1, 1]} : vector<8x5xf32> to vector<8x1xf32>
    %16 = vector.broadcast %15 : vector<8x1xf32> to vector<8x32xf32>
    %17 = arith.mulf %14, %16 : vector<8x32xf32>
    %18 = vector.extract_strided_slice %13 {offsets = [0, 32], sizes = [8, 32], strides = [1, 1]} : vector<8x128xf32> to vector<8x32xf32>
    %19 = vector.extract_strided_slice %11 {offsets = [0, 1], sizes = [8, 1], strides = [1, 1]} : vector<8x5xf32> to vector<8x1xf32>
    %20 = vector.broadcast %19 : vector<8x1xf32> to vector<8x32xf32>
    %21 = arith.mulf %18, %20 : vector<8x32xf32>
    %22 = arith.addf %17, %21 : vector<8x32xf32>
    %23 = vector.extract_strided_slice %13 {offsets = [0, 64], sizes = [8, 32], strides = [1, 1]} : vector<8x128xf32> to vector<8x32xf32>
    %24 = vector.extract_strided_slice %11 {offsets = [0, 2], sizes = [8, 1], strides = [1, 1]} : vector<8x5xf32> to vector<8x1xf32>
    %25 = vector.broadcast %24 : vector<8x1xf32> to vector<8x32xf32>
    %26 = arith.mulf %23, %25 : vector<8x32xf32>
    %27 = arith.addf %22, %26 : vector<8x32xf32>
    %28 = vector.extract_strided_slice %13 {offsets = [0, 96], sizes = [8, 32], strides = [1, 1]} : vector<8x128xf32> to vector<8x32xf32>
    %29 = vector.extract_strided_slice %11 {offsets = [0, 3], sizes = [8, 1], strides = [1, 1]} : vector<8x5xf32> to vector<8x1xf32>
    %30 = vector.broadcast %29 : vector<8x1xf32> to vector<8x32xf32>
    %31 = arith.mulf %28, %30 : vector<8x32xf32>
    %32 = arith.addf %27, %31 : vector<8x32xf32>
    %cst_6 = arith.constant 0.000000e+00 : f32
    %33 = vector.shape_cast %5 : vector<8x1xi1> to vector<8x1xi1>
    %34 = vector.broadcast %33 : vector<8x1xi1> to vector<8x32xi1>
    %35 = vector.broadcast %cst_6 : f32 to vector<8x32xf32>
    %36 = arith.select %34, %32, %35 : vector<8x32xi1>, vector<8x32xf32>
    %37 = arith.mulf %36, %36 : vector<8x32xf32>
    %cst_7 = arith.constant dense<0.000000e+00> : vector<8xf32>
    %38 = vector.multi_reduction <add>, %37, %cst_7 [1] : vector<8x32xf32> to vector<8xf32>
    %39 = vector.shape_cast %38 : vector<8xf32> to vector<8x1xf32>
    %cst_8 = arith.constant 1.000000e-24 : f32
    %40 = vector.broadcast %cst_8 : f32 to vector<8x1xf32>
    %41 = arith.maximumf %39, %40 : vector<8x1xf32>
    %42 = math.rsqrt %41 : vector<8x1xf32>
    %43 = vector.broadcast %42 : vector<8x1xf32> to vector<8x32xf32>
    %44 = arith.mulf %36, %43 : vector<8x32xf32>
    %45 = arith.mulf %44, %44 : vector<8x32xf32>
    %cst_9 = arith.constant dense<0.000000e+00> : vector<8xf32>
    %46 = vector.multi_reduction <add>, %45, %cst_9 [1] : vector<8x32xf32> to vector<8xf32>
    %47 = vector.shape_cast %46 : vector<8xf32> to vector<8x1xf32>
    %cst_10 = arith.constant 1.000000e-24 : f32
    %48 = vector.broadcast %cst_10 : f32 to vector<8x1xf32>
    %49 = arith.maximumf %47, %48 : vector<8x1xf32>
    %50 = math.rsqrt %49 : vector<8x1xf32>
    %51 = vector.broadcast %50 : vector<8x1xf32> to vector<8x32xf32>
    %52 = arith.mulf %44, %51 : vector<8x32xf32>
    %53 = vector.extract_strided_slice %11 {offsets = [0, 4], sizes = [8, 1], strides = [1, 1]} : vector<8x5xf32> to vector<8x1xf32>
    %54 = vector.broadcast %53 : vector<8x1xf32> to vector<8x32xf32>
    %55 = arith.mulf %52, %54 : vector<8x32xf32>
    %c0_11 = arith.constant 0 : index
    %c0_12 = arith.constant 0 : index
    %c0_13 = arith.constant 0 : index
    %56 = vector.load %arg4[%c0_11, %c0_12, %c0_13] : memref<1x8x32xf32, #tpu.memory_space<vmem>>, vector<1x8x32xf32>
    %57 = vector.shape_cast %56 : vector<1x8x32xf32> to vector<8x32xf32>
    %58 = vector.shape_cast %52 : vector<8x32xf32> to vector<1x8x32xf32>
    tpu.vector_store %arg4[%c0_11, %c0_12, %c0_13], %58 {strides = array<i32>} : memref<1x8x32xf32, #tpu.memory_space<vmem>>, vector<1x8x32xf32>,
    %c0_14 = arith.constant 0 : index
    %c0_15 = arith.constant 0 : index
    %c0_16 = arith.constant 0 : index
    %59 = vector.load %arg5[%c0_14, %c0_15, %c0_16] : memref<1x8x32xf32, #tpu.memory_space<vmem>>, vector<1x8x32xf32>
    %60 = vector.shape_cast %59 : vector<1x8x32xf32> to vector<8x32xf32>
    %61 = vector.shape_cast %55 : vector<8x32xf32> to vector<1x8x32xf32>
    tpu.vector_store %arg5[%c0_14, %c0_15, %c0_16], %61 {strides = array<i32>} : memref<1x8x32xf32, #tpu.memory_space<vmem>>, vector<1x8x32xf32>,
    return
  }
  func.func @transform_0(%arg0: i32, %arg1: i32) -> (i32, i32, i32) {
    %c0_i32 = arith.constant 0 : i32
    %c0_i32_0 = arith.constant 0 : i32
    return %arg0, %arg1, %c0_i32 : i32, i32, i32
  }
  func.func @transform_1(%arg0: i32, %arg1: i32) -> (i32, i32, i32) {
    %c0_i32 = arith.constant 0 : i32
    %c0_i32_0 = arith.constant 0 : i32
    return %arg0, %arg1, %c0_i32 : i32, i32, i32
  }
  func.func @transform_2(%arg0: i32, %arg1: i32) -> (i32, i32, i32) {
    %c0_i32 = arith.constant 0 : i32
    %c0_i32_0 = arith.constant 0 : i32
    return %arg0, %arg1, %c0_i32 : i32, i32, i32
  }
  func.func @transform_3(%arg0: i32, %arg1: i32) -> (i32, i32, i32) {
    %c0_i32 = arith.constant 0 : i32
    %c0_i32_0 = arith.constant 0 : i32
    return %arg0, %arg1, %c0_i32 : i32, i32, i32
  }
}

</mosaic_0001>

<llo_original>
// kernel: tpu_custom_call.1
$region0: #{tpu_custom_call.1}
  #allocation0 [shape = 'u32[]', space=smem, size = 0x4, offset = 0x4, fixed_abs, tag = 'smem constant byte address 0x4 - core index']
  #allocation1 [shape = 'u32[144,128]{1,0:T(1,128)}', space=vmem, size = 0x12000, scoped, tag = 'internal scratch']
  %s0 = inlined_call_operand.vmem [shape: f32[2,8,128], index: 0, kind: input, shape index: {}]
  %s1 = inlined_call_operand.vmem [shape: f32[2,8,5], index: 1, kind: input, shape index: {}]
  %s2 = inlined_call_operand.hbm [shape: f32[2,8,32], index: 2, kind: output, shape index: {0}]
  %s3 = inlined_call_operand.hbm [shape: f32[2,8,32], index: 3, kind: output, shape index: {1}]
  %4 = xla_tuple %s2, %s3
  %s5 = sld [smem:[#allocation0]]
  $region49: #{tpu_custom_call.1} parent=0
    _
  %s7 = ssub.s32 1, %s5
  %s8 = scalar_select 0, %s7, %s5
  $region1: #{tpu_custom_call.1} parent=0
    #allocation2 [shape = 'u8[8192]{0}', space=vmem, size = 0x2000, scoped, tag = 'output window, operand 0']
    #allocation3 [shape = 's32[2]{0}', space=sflag, size = 0x8, scoped, tag = 'scoped memory for tpu_custom_call.1']
    #allocation4 [shape = 'u8[8192]{0}', space=vmem, size = 0x2000, scoped, tag = 'output window, operand 1']
    #allocation5 [shape = 's32[2]{0}', space=sflag, size = 0x8, scoped, tag = 'scoped memory for tpu_custom_call.1']
    %9 = vsyncpa [#allocation3], 0
    %s10 = scalar_lea.sflag [#allocation3], 1
    %11 = vsyncpa %s10, 0
    %12 = vsyncpa [#allocation5], 0
    %s13 = scalar_lea.sflag [#allocation5], 1
    %14 = vsyncpa %s13, 0
    loop: start=0, step=1, limit=4
    $region2: #{tpu_custom_call.1} parent=1 // loop_pre_header
      _
    $region3: #{tpu_custom_call.1} parent=1 // loop_header
      %s16 = sphi 0, %s20
      %p17 = scmp.ge.s32.totalorder %s16, 4
      %s23 = sphi 0, %s35
      %s24 = sphi 0, %s31
      %s25 = sphi 0, %s23
      %s26 = sphi 0, %s24
      %s27 = sphi 0, %s25
      %s28 = sphi 0, %s26
      %s40 = sphi 0, %s42
      %s43 = sphi 0, %s40
      %s44 = sphi 0, %s43
      %s60 = sphi 0, %s44
      %s68 = sphi 0, %s70
      %s71 = sphi 0, %s68
      %s72 = sphi 0, %s71
      %s88 = sphi 0, %s72
      %s96 = sphi 0, %s98
      %s99 = sphi 0, %s96
      %s100 = sphi 0, %s99
      %s116 = sphi 0, %s100
      %s124 = sphi 0, %s126
      %s127 = sphi 0, %s124
      %s128 = sphi 0, %s127
      %s144 = sphi 0, %s128
    $region4: #{tpu_custom_call.1} parent=1 // loop_header_branch
      %19 = sbr.rel (%p17) target = $region8
    $region5: #{tpu_custom_call.1} parent=1 // loop_body
      %s21 = ssub.s32 %s16, 1
      %s22 = ssub.s32 %s16, 2
      %s29 = sadd.s32 1, %s24
      %p30 = scmp.ge.s32.totalorder %s29, 1
      %s31 = scalar_select %p30, 0, %s29
      %s32 = sadd.s32 1, %s23
      %s33 = scalar_select %p30, %s32, %s23
      %p34 = scmp.ge.s32.totalorder %s33, 2
      %s35 = scalar_select %p34, 0, %s33
      %s36 = ssub.s32 %s23, %s35
      %s37 = ssub.s32 %s24, %s31
      %s38 = sor.u32 %s36, %s37
      %p39 = scmp.eq.s32.totalorder %s38, 0
      %s41 = sadd.s32 %s40, 1
      %s42 = scalar_select %p39, %s40, %s41
      %p45 = pneg %p39
      %p46 = scmp.eq.s32.totalorder %s16, 1
      %p47 = por %p45, %p46
      %p48 = scmp.ne.s32.totalorder %s40, %s43
      %p49 = scmp.eq.s32.totalorder %s16, 0
      %p50 = por %p48, %p49
      %p51 = scmp.ne.s32.totalorder %s40, %s43
      %p52 = scmp.eq.s32.totalorder %s21, 1
      %p53 = por %p51, %p52
      %p54 = scmp.ne.s32.totalorder %s43, %s44
      %p55 = scmp.eq.s32.totalorder %s21, 0
      %p56 = por %p54, %p55
      %p57 = scmp.ne.s32.totalorder %s43, %s44
      %p58 = scmp.eq.s32.totalorder %s22, 1
      %p59 = por %p57, %p58
      %p61 = scmp.ne.s32.totalorder %s44, %s60
      %p62 = scmp.eq.s32.totalorder %s22, 0
      %p63 = por %p61, %p62
      %s64 = ssub.s32 %s23, %s35
      %s65 = ssub.s32 %s24, %s31
      %s66 = sor.u32 %s64, %s65
      %p67 = scmp.eq.s32.totalorder %s66, 0
      %s69 = sadd.s32 %s68, 1
      %s70 = scalar_select %p67, %s68, %s69
      %p73 = pneg %p67
      %p74 = scmp.eq.s32.totalorder %s16, 1
      %p75 = por %p73, %p74
      %p76 = scmp.ne.s32.totalorder %s68, %s71
      %p77 = scmp.eq.s32.totalorder %s16, 0
      %p78 = por %p76, %p77
      %p79 = scmp.ne.s32.totalorder %s68, %s71
      %p80 = scmp.eq.s32.totalorder %s21, 1
      %p81 = por %p79, %p80
      %p82 = scmp.ne.s32.totalorder %s71, %s72
      %p83 = scmp.eq.s32.totalorder %s21, 0
      %p84 = por %p82, %p83
      %p85 = scmp.ne.s32.totalorder %s71, %s72
      %p86 = scmp.eq.s32.totalorder %s22, 1
      %p87 = por %p85, %p86
      %p89 = scmp.ne.s32.totalorder %s72, %s88
      %p90 = scmp.eq.s32.totalorder %s22, 0
      %p91 = por %p89, %p90
      %s92 = ssub.s32 %s23, %s35
      %s93 = ssub.s32 %s24, %s31
      %s94 = sor.u32 %s92, %s93
      %p95 = scmp.eq.s32.totalorder %s94, 0
      %s97 = sadd.s32 %s96, 1
      %s98 = scalar_select %p95, %s96, %s97
      %p101 = pneg %p95
      %p102 = scmp.eq.s32.totalorder %s16, 1
      %p103 = por %p101, %p102
      %p104 = scmp.ne.s32.totalorder %s96, %s99
      %p105 = scmp.eq.s32.totalorder %s16, 0
      %p106 = por %p104, %p105
      %p107 = scmp.ne.s32.totalorder %s96, %s99
      %p108 = scmp.eq.s32.totalorder %s21, 1
      %p109 = por %p107, %p108
      %p110 = scmp.ne.s32.totalorder %s99, %s100
      %p111 = scmp.eq.s32.totalorder %s21, 0
      %p112 = por %p110, %p111
      %p113 = scmp.ne.s32.totalorder %s99, %s100
      %p114 = scmp.eq.s32.totalorder %s22, 1
      %p115 = por %p113, %p114
      %p117 = scmp.ne.s32.totalorder %s100, %s116
      %p118 = scmp.eq.s32.totalorder %s22, 0
      %p119 = por %p117, %p118
      %s120 = ssub.s32 %s23, %s35
      %s121 = ssub.s32 %s24, %s31
      %s122 = sor.u32 %s120, %s121
      %p123 = scmp.eq.s32.totalorder %s122, 0
      %s125 = sadd.s32 %s124, 1
      %s126 = scalar_select %p123, %s124, %s125
      %p129 = pneg %p123
      %p130 = scmp.eq.s32.totalorder %s16, 1
      %p131 = por %p129, %p130
      %p132 = scmp.ne.s32.totalorder %s124, %s127
      %p133 = scmp.eq.s32.totalorder %s16, 0
      %p134 = por %p132, %p133
      %p135 = scmp.ne.s32.totalorder %s124, %s127
      %p136 = scmp.eq.s32.totalorder %s21, 1
      %p137 = por %p135, %p136
      %p138 = scmp.ne.s32.totalorder %s127, %s128
      %p139 = scmp.eq.s32.totalorder %s21, 0
      %p140 = por %p138, %p139
      %p141 = scmp.ne.s32.totalorder %s127, %s128
      %p142 = scmp.eq.s32.totalorder %s22, 1
      %p143 = por %p141, %p142
      %p145 = scmp.ne.s32.totalorder %s128, %s144
      %p146 = scmp.eq.s32.totalorder %s22, 0
      %p147 = por %p145, %p146
      %p148 = scmp.le.s32.totalorder 1, %s16
      %p149 = scmp.lt.s32.totalorder %s16, 3
      %p150 = pnand %p148, %p149
      %p151 = pneg %p150
      // Predicated region
      $region9: #{tpu_custom_call.1} parent=5 // pred_check
        _
      $region10: #{tpu_custom_call.1} parent=5 // pred_check_branch
        %153 = sbr.rel (%p150) target = $region12
      $region11: #{tpu_custom_call.1} parent=5 // pred_region
        %s154 = ssub.s32 %s16, 1
      $region12: #{tpu_custom_call.1} parent=5 // pred_fallthru
        _
      %p155 = scmp.lt.s32.totalorder %s16, 2
      // Predicated region
      $region13: #{tpu_custom_call.1} parent=5 // pred_check
        %p156 = pneg %p155
      $region14: #{tpu_custom_call.1} parent=5 // pred_check_branch
        %158 = sbr.rel (%p156) target = $region16
      $region15: #{tpu_custom_call.1} parent=5 // pred_region
        // Predicated region
        $region17: #{tpu_custom_call.1} parent=15 // pred_check
          %p159 = pneg %p50
        $region18: #{tpu_custom_call.1} parent=15 // pred_check_branch
          %161 = sbr.rel (%p159) target = $region20
        $region19: #{tpu_custom_call.1} parent=15 // pred_region
          %p162 = scmp.lt.s32.totalorder %s23, 1
          %s163 = scalar_select %p162, %s23, 1
          %p164 = scmp.lt.s32.totalorder %s24, 0
          %s165 = scalar_select %p164, %s24, 0
          %s166 = sadd.s32 %s165, %s163
          %s167 = smul.addr %s166, 8
          %s168 = scalar_lea.vmem %s0, %s167
        $region20: #{tpu_custom_call.1} parent=15 // pred_fallthru
          _
        // Predicated region
        $region21: #{tpu_custom_call.1} parent=15 // pred_check
          %p169 = pneg %p78
        $region22: #{tpu_custom_call.1} parent=15 // pred_check_branch
          %171 = sbr.rel (%p169) target = $region24
        $region23: #{tpu_custom_call.1} parent=15 // pred_region
          %p172 = scmp.lt.s32.totalorder %s23, 1
          %s173 = scalar_select %p172, %s23, 1
          %p174 = scmp.lt.s32.totalorder %s24, 0
          %s175 = scalar_select %p174, %s24, 0
          %s176 = sadd.s32 %s175, %s173
          %s177 = smul.addr %s176, 8
          %s178 = scalar_lea.vmem %s1, %s177
        $region24: #{tpu_custom_call.1} parent=15 // pred_fallthru
          _
      $region16: #{tpu_custom_call.1} parent=5 // pred_fallthru
        _
      %p179 = scmp.le.s32.totalorder 1, %s16
      %p180 = scmp.lt.s32.totalorder %s16, 3
      %p181 = pnand %p179, %p180
      %p182 = pneg %p181
      // Predicated region
      $region25: #{tpu_custom_call.1} parent=5 // pred_check
        _
      $region26: #{tpu_custom_call.1} parent=5 // pred_check_branch
        %184 = sbr.rel (%p181) target = $region28
      $region27: #{tpu_custom_call.1} parent=5 // pred_region
        %s185 = ssub.s32 %s16, 1
        %p186 = scmp.lt.s32.totalorder %s25, 1
        %s187 = scalar_select %p186, %s25, 1
        %p188 = scmp.lt.s32.totalorder %s26, 0
        %s189 = scalar_select %p188, %s26, 0
        %s190 = sadd.s32 %s189, %s187
        %s191 = smul.addr %s190, 8
        %s192 = scalar_lea.vmem %s0, %s191
        %p193 = pneg %p56
        %p194 = pneg %p53
        %p195 = scmp.lt.s32.totalorder %s25, 1
        %s196 = scalar_select %p195, %s25, 1
        %p197 = scmp.lt.s32.totalorder %s26, 0
        %s198 = scalar_select %p197, %s26, 0
        %s199 = sadd.s32 %s198, %s196
        %s200 = smul.addr %s199, 8
        %s201 = scalar_lea.vmem %s1, %s200
        %p202 = pneg %p84
        %p203 = pneg %p81
        %p204 = pneg %p112
        %p205 = pneg %p109
        %s206 = sand.u32 %s99, 1
        %s207 = scalar_lea.sflag [#allocation3], %s206
        %s208 = sand.u32 %s99, 1
        %s209 = smul.addr %s208, 8
        %s210 = scalar_lea.vmem [#allocation2], %s209
        %p211 = pneg %p140
        %p212 = pneg %p137
        %s213 = sand.u32 %s127, 1
        %s214 = scalar_lea.sflag [#allocation5], %s213
        %s215 = sand.u32 %s127, 1
        %s216 = smul.addr %s215, 8
        %s217 = scalar_lea.vmem [#allocation4], %s216
        %p218 = scmp.lt.s32.totalorder %s25, 1
        %s219 = scalar_select %p218, %s25, 1
        %p220 = scmp.lt.s32.totalorder %s26, 0
        %s221 = scalar_select %p220, %s26, 0
        %s222 = sadd.s32 %s221, %s219
        %s223 = smul.addr %s222, 8
        %s224 = scalar_lea.vmem %s0, %s223
        %p225 = scmp.lt.s32.totalorder %s25, 1
        %s226 = scalar_select %p225, %s25, 1
        %p227 = scmp.lt.s32.totalorder %s26, 0
        %s228 = scalar_select %p227, %s26, 0
        %s229 = sadd.s32 %s228, %s226
        %s230 = smul.addr %s229, 8
        %s231 = scalar_lea.vmem %s1, %s230
        %s232 = smul.u32 %s26, 8
        %v233 = vlaneseq
        %v234 = vshrl.u32 %v233, 7
        %v235 = vstv %s232
        %v236 = vadd.s32 %v235, %v234
        %vm237 = vcmp.lt.s32.totalorder %v236, 8
        %v238 = vld [vmem:[%s231] sm:$0xff]
        %v239 = vsel %vm237, 1, 0
        %vm240 = vcmp.eq.s32.totalorder %v239, 1
        %v241 = vsel %vm240, %v238, 0.0
        %v242 = vld [vmem:[%s224] sm:$0xff]
        %244 = vset.pattern.permute.xlu0 0
        %245 = vperm.xlu0 %244, %v241
        %v246 = vpop.permute.xlu0 %245
        %v248 = vmul.f32 %v242, %v246
        %249 = vset.pattern.permute.xlu0 1
        %250 = vperm.xlu0 %249, %v241
        %v251 = vpop.permute.xlu0 %250
        %v253 = vmul.f32 %v242, %v251
        %255 = vrot.lane.b32.xlu0 %v253, 96
        %v256 = vpop.permute.xlu0 %255
        %v258 = vadd.f32 %v248, %v256
        %259 = vset.pattern.permute.xlu0 2
        %260 = vperm.xlu0 %259, %v241
        %v261 = vpop.permute.xlu0 %260
        %v263 = vmul.f32 %v242, %v261
        %265 = vrot.lane.b32.xlu0 %v263, 64
        %v266 = vpop.permute.xlu0 %265
        %v268 = vadd.f32 %v258, %v266
        %269 = vset.pattern.permute.xlu0 3
        %270 = vperm.xlu0 %269, %v241
        %v271 = vpop.permute.xlu0 %270
        %v273 = vmul.f32 %v242, %v271
        %275 = vrot.lane.b32.xlu0 %v273, 32
        %v276 = vpop.permute.xlu0 %275
        %v278 = vadd.f32 %v268, %v276
        %v279 = vsel %vm240, %v278, 0.0
        %v280 = vmul.f32 %v279, %v279
        %vm281 = vcmask 261120
        %v282 = vsel %vm281, %v280, 0.0
        %283 = vadd.xlane.f32.xlu0 %v282
        %v284 = vpop.xlane.xlu0 %283
        %v285 = vmax.f32 %v284, 1e-24
        %v286 = vrsqrt.pop %v285
        %v287 = vmul.f32 %v279, %v286
        %v288 = vmul.f32 %v287, %v287
        %v289 = vsel %vm281, %v288, 0.0
        %290 = vadd.xlane.f32.xlu0 %v289
        %v291 = vpop.xlane.xlu0 %290
        %v292 = vmax.f32 %v291, 1e-24
        %v293 = vrsqrt.pop %v292
        %v294 = vmul.f32 %v287, %v293
        %295 = vset.pattern.permute.xlu0 4
        %296 = vperm.xlu0 %295, %v241
        %v297 = vpop.permute.xlu0 %296
        %v299 = vmul.f32 %v294, %v297
        %300 = vst.msk [vmem:[%s210] sm:$0xff] %vm281, %v294
        %301 = vst.msk [vmem:[%s217] sm:$0xff] %vm281, %v299
        %s302 = sand.u32 %s99, 1
        %s303 = scalar_lea.sflag [#allocation3], %s302
        %s304 = sand.u32 %s99, 1
        %s305 = smul.addr %s304, 8
        %s306 = scalar_lea.vmem [#allocation2], %s305
        %s307 = sand.u32 %s127, 1
        %s308 = scalar_lea.sflag [#allocation5], %s307
        %s309 = sand.u32 %s127, 1
        %s310 = smul.addr %s309, 8
        %s311 = scalar_lea.vmem [#allocation4], %s310
        // Predicated region
        $region29: #{tpu_custom_call.1} parent=27 // pred_check
          %p312 = pneg %p109
        $region30: #{tpu_custom_call.1} parent=27 // pred_check_branch
          %314 = sbr.rel (%p312) target = $region32
        $region31: #{tpu_custom_call.1} parent=27 // pred_region
          %s316 = ssub.s32 128, 128
          %317 = vsyncadd %s303, %s316
          %s318 = sadd.s32 %s26, %s25
          %s319 = smul.addr %s318, 128
          %s320 = scalar_lea.hbm %s2, %s319
          %s322 = sshll.u32 %s306, 4
          %s323 = int_to_ptr.vmem [resolvable:$true] %s322
          %325 = dma.vmem_to_hbm [thread:$0]  %s323, 128, %s320, %s303
        $region32: #{tpu_custom_call.1} parent=27 // pred_fallthru
          _
        // Predicated region
        $region33: #{tpu_custom_call.1} parent=27 // pred_check
          %p326 = pneg %p137
        $region34: #{tpu_custom_call.1} parent=27 // pred_check_branch
          %328 = sbr.rel (%p326) target = $region36
        $region35: #{tpu_custom_call.1} parent=27 // pred_region
          %s330 = ssub.s32 128, 128
          %331 = vsyncadd %s308, %s330
          %s332 = sadd.s32 %s26, %s25
          %s333 = smul.addr %s332, 128
          %s334 = scalar_lea.hbm %s3, %s333
          %s336 = sshll.u32 %s311, 4
          %s337 = int_to_ptr.vmem [resolvable:$true] %s336
          %339 = dma.vmem_to_hbm [thread:$0]  %s337, 128, %s334, %s308
        $region36: #{tpu_custom_call.1} parent=27 // pred_fallthru
          _
      $region28: #{tpu_custom_call.1} parent=5 // pred_fallthru
        _
      %p340 = scmp.le.s32.totalorder 2, %s16
      // Predicated region
      $region37: #{tpu_custom_call.1} parent=5 // pred_check
        %p341 = pneg %p340
      $region38: #{tpu_custom_call.1} parent=5 // pred_check_branch
        %343 = sbr.rel (%p341) target = $region40
      $region39: #{tpu_custom_call.1} parent=5 // pred_region
        %s344 = ssub.s32 %s16, 2
        // Predicated region
        $region41: #{tpu_custom_call.1} parent=39 // pred_check
          %p345 = pneg %p115
        $region42: #{tpu_custom_call.1} parent=39 // pred_check_branch
          %347 = sbr.rel (%p345) target = $region44
        $region43: #{tpu_custom_call.1} parent=39 // pred_region
          %s348 = sand.u32 %s100, 1
          %s349 = scalar_lea.sflag [#allocation3], %s348
          %s350 = sand.u32 %s100, 1
          %s351 = smul.addr %s350, 8
          %s352 = scalar_lea.vmem [#allocation2], %s351
          %353 = dma.done %s349, 128
        $region44: #{tpu_custom_call.1} parent=39 // pred_fallthru
          _
        // Predicated region
        $region45: #{tpu_custom_call.1} parent=39 // pred_check
          %p354 = pneg %p143
        $region46: #{tpu_custom_call.1} parent=39 // pred_check_branch
          %356 = sbr.rel (%p354) target = $region48
        $region47: #{tpu_custom_call.1} parent=39 // pred_region
          %s357 = sand.u32 %s128, 1
          %s358 = scalar_lea.sflag [#allocation5], %s357
          %s359 = sand.u32 %s128, 1
          %s360 = smul.addr %s359, 8
          %s361 = scalar_lea.vmem [#allocation4], %s360
          %362 = dma.done %s358, 128
        $region48: #{tpu_custom_call.1} parent=39 // pred_fallthru
          _
      $region40: #{tpu_custom_call.1} parent=5 // pred_fallthru
        _
    $region6: #{tpu_custom_call.1} parent=1 // loop_footer
      %s20 = sadd.s32 1, %s16
    $region7: #{tpu_custom_call.1} parent=1 // loop_footer_branch
      %15 = sbr.rel target = $region3
    $region8: #{tpu_custom_call.1} parent=1 // loop_exit
      _
    %363 = vsyncpa [#allocation3], 1
    %s364 = scalar_lea.sflag [#allocation3], 1
    %365 = vsyncpa %s364, 1
    %366 = vsyncpa [#allocation5], 1
    %s367 = scalar_lea.sflag [#allocation5], 1
    %368 = vsyncpa %s367, 1

</llo_original>
